<compile_context>
chip_gen: v7x
topology: tpu7x:2x2x1
jax: 0.10.0
libtpu: 0.0.40
codegen_flags: <defaults>
</compile_context>

<pallas_src>
import jax
import jax.numpy as jnp
from jax import lax
from jax.experimental import pallas as pl
from jax.experimental.pallas import tpu as pltpu


def _ceil_div(a, b):
    return -(-a // b)


def _round_up(n, m):
    return _ceil_div(n, m) * m


# dot_general dimension numbers for an "NT" contraction: contract the last
# (feature) axis of both operands ->  [2H, d] x [TB, d] -> [2H, TB].
_NT = (((1,), (1,)), ((), ()))


def _fused_double_q_kernel(obs_ref, act_ref, skl_ref,
                           w1o_ref, w1a_ref, w1s_ref, w2_ref, w3_ref,
                           b1_ref, b2_ref, b3_ref, o_ref):
    """One grid step: both Q heads for one TB-wide batch tile.

    Compute orientation: hidden units on sublanes, batch on lanes (the MXU's
    N axis), so the huge batch dimension never streams through the MXU row
    port and the single output store is lane-dense.

      obs/act/skl refs : [TB, d_m]   natural-layout batch tiles
      w1{o,a,s}_ref    : [2H, d_m]   per-modality slices of W1^T
                                     (rows 0:H = Q1, rows H:2H = Q2)
      w2_ref           : [2H, 2H]    block-diagonal (heads stay independent)
      w3_ref           : [8, 2H]     row 0 -> q1, row 1 -> q2, rest zero
      b1_ref/b2_ref    : [2H, 1]     f32
      b3_ref           : [8, 1]      f32
      o_ref            : [2, TB]     row 0 = q1, row 1 = q2  (lane-dense)
    """
    cdt = w1o_ref.dtype

    # Layer 1: fused over modalities; the NT dot_general folds the x-transpose
    # into the MXU operand feed (no wrapper or XLU relayout of x).
    h = lax.dot_general(w1o_ref[...], obs_ref[...].astype(cdt), _NT,
                        preferred_element_type=jnp.float32)
    h += lax.dot_general(w1a_ref[...], act_ref[...].astype(cdt), _NT,
                         preferred_element_type=jnp.float32)
    h += lax.dot_general(w1s_ref[...], skl_ref[...].astype(cdt), _NT,
                         preferred_element_type=jnp.float32)
    h = jnp.maximum(h + b1_ref[...], 0.0)

    # Layer 2: block-diagonal [2H, 2H] keeps the two Q heads independent.
    h = jnp.dot(w2_ref[...], h.astype(cdt), preferred_element_type=jnp.float32)
    h = jnp.maximum(h + b2_ref[...], 0.0)

    # Layer 3: [8, 2H] head slab -> [8, TB]; only rows 0/1 carry q1/q2.
    q = jnp.dot(w3_ref[...], h.astype(cdt), preferred_element_type=jnp.float32)
    q = q + b3_ref[...]
    o_ref[...] = q[:2, :].astype(o_ref.dtype)


def pack_double_q_params(q1_params, q2_params, obs_dim, action_dim, skill_dim,
                         compute_dtype=jnp.bfloat16):
    """Pack both Q-nets into the kernel's resident weight/bias layout."""
    w1_1, b1_1, w2_1, b2_1, w3_1, b3_1 = q1_params
    w1_2, b1_2, w2_2, b2_2, w3_2, b3_2 = q2_params
    h = w1_1.shape[-1]
    h2 = 2 * h
    in_dim = obs_dim + action_dim + skill_dim
    assert w1_1.shape[0] == in_dim and w1_2.shape[0] == in_dim

    def w1_block(lo, hi):                      # [2H, hi - lo], head-stacked W1^T
        return jnp.concatenate([w1_1[lo:hi].T, w1_2[lo:hi].T],
                               axis=0).astype(compute_dtype)

    w1o_t = w1_block(0, obs_dim)
    w1a_t = w1_block(obs_dim, obs_dim + action_dim)
    w1s_t = w1_block(obs_dim + action_dim, in_dim)

    w2p = jnp.zeros((h2, h2), jnp.float32)
    w2p = w2p.at[:h, :h].set(w2_1.T).at[h:, h:].set(w2_2.T)   # block-diagonal
    w2p = w2p.astype(compute_dtype)

    w3t = jnp.zeros((8, h2), jnp.float32)
    w3t = w3t.at[0, :h].set(w3_1[:, 0]).at[1, h:].set(w3_2[:, 0])
    w3t = w3t.astype(compute_dtype)

    # Biases stay f32 (VPU path, f32 accumulation).
    b1p = jnp.concatenate([b1_1, b1_2])[:, None].astype(jnp.float32)   # [2H, 1]
    b2p = jnp.concatenate([b2_1, b2_2])[:, None].astype(jnp.float32)   # [2H, 1]
    b3p = jnp.zeros((8, 1), jnp.float32).at[0, 0].set(b3_1[0]).at[1, 0].set(b3_2[0])
    return w1o_t, w1a_t, w1s_t, w2p, w3t, b1p, b2p, b3p


def double_q_critic(obs, action, skill, q1_params, q2_params, *,
                    compute_dtype=jnp.bfloat16, max_batch_tile=8192,
                    vmem_limit_bytes=None):
    """Pallas forward of DoubleQCritic. Returns (q1, q2), each [B, 1] f32.

    obs/action/skill are consumed in their natural [B, dim] layout and dtype
    (no wrapper-side concat/transpose/pad/cast passes over x).  compute_dtype
    controls the MXU operand dtype (weights + in-kernel x cast); accumulation,
    biases and ReLU stay f32.  Use compute_dtype=jnp.float32 for exact parity.
    """
    batch = obs.shape[0]
    assert action.shape[0] == batch and skill.shape[0] == batch
    assert max_batch_tile >= 128 and max_batch_tile % 128 == 0
    obs_dim, act_dim, skill_dim = obs.shape[-1], action.shape[-1], skill.shape[-1]
    hidden = q1_params[0].shape[-1]
    h2 = 2 * hidden

    w1o_t, w1a_t, w1s_t, w2p, w3t, b1p, b2p, b3p = pack_double_q_params(
        q1_params, q2_params, obs_dim, act_dim, skill_dim, compute_dtype)

    # Batch (lane) tiling: single block for small batches; otherwise >= 2
    # 128-aligned blocks so the "parallel" grid axis shards across both
    # TensorCores on v7x and per-step overhead is amortized.  A ragged final
    # block is fine: boundary DMAs are clamped and the garbage lanes end up in
    # output columns >= batch which are sliced off below.
    if batch <= min(512, max_batch_tile):
        tb = batch
    else:
        tb = min(max_batch_tile, _round_up(_ceil_div(batch, 2), 128))
    nblk = _ceil_div(batch, tb)
    b_pad = nblk * tb

    if vmem_limit_bytes is None:
        xbytes = jnp.dtype(obs.dtype).itemsize
        est = (3 * 2 * tb * 128 * xbytes      # double-buffered x tiles (lane-padded)
               + 2 * 8 * tb * 4               # double-buffered output tiles
               + 6 * h2 * tb * 4              # f32 intermediates (h, partial sums)
               + 3 * tb * 128 * 2             # in-kernel compute-dtype casts of x
               + (8 << 20))                   # weights/biases + compiler scratch headroom
        # Stay within v7x's 64 MiB physical VMEM; on v5e/v6e (128 MiB) pass a
        # larger explicit limit together with a bigger max_batch_tile.
        vmem_limit_bytes = max(32 << 20, min(est, 64 << 20))

    qt = pl.pallas_call(
        _fused_double_q_kernel,
        out_shape=jax.ShapeDtypeStruct((2, b_pad), jnp.float32),
        grid_spec=pltpu.PrefetchScalarGridSpec(
            num_scalar_prefetch=0,
            grid=(nblk,),
            in_specs=[
                pl.BlockSpec((tb, obs_dim), lambda i: (i, 0)),     # batch-tiled x
                pl.BlockSpec((tb, act_dim), lambda i: (i, 0)),
                pl.BlockSpec((tb, skill_dim), lambda i: (i, 0)),
                pl.BlockSpec((h2, obs_dim), lambda i: (0, 0)),     # resident weights
                pl.BlockSpec((h2, act_dim), lambda i: (0, 0)),
                pl.BlockSpec((h2, skill_dim), lambda i: (0, 0)),
                pl.BlockSpec((h2, h2), lambda i: (0, 0)),
                pl.BlockSpec((8, h2), lambda i: (0, 0)),
                pl.BlockSpec((h2, 1), lambda i: (0, 0)),           # resident biases
                pl.BlockSpec((h2, 1), lambda i: (0, 0)),
                pl.BlockSpec((8, 1), lambda i: (0, 0)),
            ],
            out_specs=pl.BlockSpec((2, tb), lambda i: (0, i)),     # lane-dense [2, B]
        ),
        compiler_params=pltpu.CompilerParams(
            dimension_semantics=("parallel",),    # shard batch blocks across TCs
            vmem_limit_bytes=int(vmem_limit_bytes)),
    )(obs, action, skill, w1o_t, w1a_t, w1s_t, w2p, w3t, b1p, b2p, b3p)

    q1 = qt[0, :batch][:, None]
    q2 = qt[1, :batch][:, None]
    return q1, q2


def init_q_params(key, in_dim, hidden_dim):
    """Deterministic synthetic init of one Q-network (hidden_depth=2)."""
    ks = jax.random.split(key, 6)
    s1 = 1.0 / jnp.sqrt(in_dim)
    s2 = 1.0 / jnp.sqrt(hidden_dim)
    w1 = jax.random.normal(ks[0], (in_dim, hidden_dim), jnp.float32) * s1
    b1 = jax.random.normal(ks[1], (hidden_dim,), jnp.float32) * 0.1
    w2 = jax.random.normal(ks[2], (hidden_dim, hidden_dim), jnp.float32) * s2
    b2 = jax.random.normal(ks[3], (hidden_dim,), jnp.float32) * 0.1
    w3 = jax.random.normal(ks[4], (hidden_dim, 1), jnp.float32) * s2
    b3 = jax.random.normal(ks[5], (1,), jnp.float32) * 0.1
    return (w1, b1, w2, b2, w3, b3)


if __name__ == "__main__":
    # Small, module-consistent shapes.
    batch = 8
    obs_dim, action_dim, skill_dim = 17, 6, 9   # in_dim = 32
    hidden_dim = 32
    in_dim = obs_dim + action_dim + skill_dim

    key = jax.random.PRNGKey(0)
    k_obs, k_act, k_skl, k_q1, k_q2 = jax.random.split(key, 5)

    obs = jax.random.normal(k_obs, (batch, obs_dim), jnp.float32)
    action = jax.random.normal(k_act, (batch, action_dim), jnp.float32)
    skill = jax.random.normal(k_skl, (batch, skill_dim), jnp.float32)

    q1_params = init_q_params(k_q1, in_dim, hidden_dim)
    q2_params = init_q_params(k_q2, in_dim, hidden_dim)

    # Pure-JAX reference (two independent MLPs, as in the PyTorch module).
    def ref_mlp(xv, p):
        w1, b1, w2, b2, w3, b3 = p
        hh = jnp.maximum(xv @ w1 + b1, 0.0)
        hh = jnp.maximum(hh @ w2 + b2, 0.0)
        return hh @ w3 + b3

    x = jnp.concatenate([obs, action, skill], axis=-1)
    r1, r2 = ref_mlp(x, q1_params), ref_mlp(x, q2_params)

    # 1) Default (bf16 MXU operands, f32 accumulation) path.
    q1, q2 = double_q_critic(obs, action, skill, q1_params, q2_params)
    jax.block_until_ready((q1, q2))
    assert q1.shape == (batch, 1) and q2.shape == (batch, 1)
    assert jnp.allclose(q1, r1, rtol=5e-2, atol=2.5e-1), float(jnp.max(jnp.abs(q1 - r1)))
    assert jnp.allclose(q2, r2, rtol=5e-2, atol=2.5e-1), float(jnp.max(jnp.abs(q2 - r2)))

    # 2) Exact f32 parity path.
    q1f, q2f = double_q_critic(obs, action, skill, q1_params, q2_params,
                               compute_dtype=jnp.float32)
    jax.block_until_ready((q1f, q2f))
    assert jnp.allclose(q1f, r1, atol=1e-4), float(jnp.max(jnp.abs(q1f - r1)))
    assert jnp.allclose(q2f, r2, atol=1e-4), float(jnp.max(jnp.abs(q2f - r2)))

    # 3) Multi-block grid path (2 batch tiles -> exercises pipelining and the
    #    "parallel" batch axis used for v7x megacore sharding).
    batch2 = 1024
    k2 = jax.random.split(jax.random.PRNGKey(1), 3)
    obs2 = jax.random.normal(k2[0], (batch2, obs_dim), jnp.float32)
    act2 = jax.random.normal(k2[1], (batch2, action_dim), jnp.float32)
    skl2 = jax.random.normal(k2[2], (batch2, skill_dim), jnp.float32)
    q1b, q2b = double_q_critic(obs2, act2, skl2, q1_params, q2_params,
                               compute_dtype=jnp.float32)
    jax.block_until_ready((q1b, q2b))
    x2 = jnp.concatenate([obs2, act2, skl2], axis=-1)
    r1b, r2b = ref_mlp(x2, q1_params), ref_mlp(x2, q2_params)
    assert q1b.shape == (batch2, 1) and q2b.shape == (batch2, 1)
    assert jnp.allclose(q1b, r1b, atol=1e-4), float(jnp.max(jnp.abs(q1b - r1b)))
    assert jnp.allclose(q2b, r2b, atol=1e-4), float(jnp.max(jnp.abs(q2b - r2b)))

    # TODO(synk): self.outputs dict / log() histogram+param logging is host-side
    # bookkeeping with no kernel equivalent.
    print("KERNEL_OK")
</pallas_src>

<mosaic_0001>
module attributes {stable_mosaic.version = 11 : i64} {
  func.func @_fused_double_q_kernel(%arg0: i32, %arg1: memref<8x17xf32, #tpu.memory_space<vmem>>, %arg2: memref<8x6xf32, #tpu.memory_space<vmem>>, %arg3: memref<8x9xf32, #tpu.memory_space<vmem>>, %arg4: memref<64x17xbf16, #tpu.memory_space<vmem>>, %arg5: memref<64x6xbf16, #tpu.memory_space<vmem>>, %arg6: memref<64x9xbf16, #tpu.memory_space<vmem>>, %arg7: memref<64x64xbf16, #tpu.memory_space<vmem>>, %arg8: memref<8x64xbf16, #tpu.memory_space<vmem>>, %arg9: memref<64x1xf32, #tpu.memory_space<vmem>>, %arg10: memref<64x1xf32, #tpu.memory_space<vmem>>, %arg11: memref<8x1xf32, #tpu.memory_space<vmem>>, %arg12: memref<2x8xf32, #tpu.memory_space<vmem>>) attributes {dimension_semantics = [#tpu.dimension_semantics<parallel>], iteration_bounds = array<i64: 1>, scalar_prefetch = 0 : i64, scratch_operands = 0 : i64, tpu.core_type = #tpu.core_type<tc>, window_params = [{transform_indices = @transform_0, window_bounds = array<i64: 8, 17>}, {transform_indices = @transform_1, window_bounds = array<i64: 8, 6>}, {transform_indices = @transform_2, window_bounds = array<i64: 8, 9>}, {pipeline_mode = #tpu.pipeline_mode<synchronous>, transform_indices = @transform_3, window_bounds = array<i64: 64, 17>}, {pipeline_mode = #tpu.pipeline_mode<synchronous>, transform_indices = @transform_4, window_bounds = array<i64: 64, 6>}, {pipeline_mode = #tpu.pipeline_mode<synchronous>, transform_indices = @transform_5, window_bounds = array<i64: 64, 9>}, {pipeline_mode = #tpu.pipeline_mode<synchronous>, transform_indices = @transform_6, window_bounds = array<i64: 64, 64>}, {pipeline_mode = #tpu.pipeline_mode<synchronous>, transform_indices = @transform_7, window_bounds = array<i64: 8, 64>}, {pipeline_mode = #tpu.pipeline_mode<synchronous>, transform_indices = @transform_8, window_bounds = array<i64: 64, 1>}, {pipeline_mode = #tpu.pipeline_mode<synchronous>, transform_indices = @transform_9, window_bounds = array<i64: 64, 1>}, {pipeline_mode = #tpu.pipeline_mode<synchronous>, transform_indices = @transform_10, window_bounds = array<i64: 8, 1>}, {transform_indices = @transform_11, window_bounds = array<i64: 2, 8>}]} {
    %c0 = arith.constant 0 : index
    %c0_0 = arith.constant 0 : index
    %0 = vector.load %arg4[%c0, %c0_0] : memref<64x17xbf16, #tpu.memory_space<vmem>>, vector<64x17xbf16>
    %c0_1 = arith.constant 0 : index
    %c0_2 = arith.constant 0 : index
    %1 = vector.load %arg1[%c0_1, %c0_2] : memref<8x17xf32, #tpu.memory_space<vmem>>, vector<8x17xf32>
    %2 = arith.truncf %1 : vector<8x17xf32> to vector<8x17xbf16>
    %cst = arith.constant dense<0.000000e+00> : vector<64x8xf32>
    %3 = tpu.matmul %0, %2, %cst {dimension_numbers = #tpu.dot_dimension_numbers<[1], [1], [0], [0], [0, 0, 1, 0], [], []>} : vector<64x17xbf16>, vector<8x17xbf16>, vector<64x8xf32> -> vector<64x8xf32>
    %c0_3 = arith.constant 0 : index
    %c0_4 = arith.constant 0 : index
    %4 = vector.load %arg5[%c0_3, %c0_4] : memref<64x6xbf16, #tpu.memory_space<vmem>>, vector<64x6xbf16>
    %c0_5 = arith.constant 0 : index
    %c0_6 = arith.constant 0 : index
    %5 = vector.load %arg2[%c0_5, %c0_6] : memref<8x6xf32, #tpu.memory_space<vmem>>, vector<8x6xf32>
    %6 = arith.truncf %5 : vector<8x6xf32> to vector<8x6xbf16>
    %cst_7 = arith.constant dense<0.000000e+00> : vector<64x8xf32>
    %7 = tpu.matmul %4, %6, %cst_7 {dimension_numbers = #tpu.dot_dimension_numbers<[1], [1], [0], [0], [0, 0, 1, 0], [], []>} : vector<64x6xbf16>, vector<8x6xbf16>, vector<64x8xf32> -> vector<64x8xf32>
    %8 = arith.addf %3, %7 : vector<64x8xf32>
    %c0_8 = arith.constant 0 : index
    %c0_9 = arith.constant 0 : index
    %9 = vector.load %arg6[%c0_8, %c0_9] : memref<64x9xbf16, #tpu.memory_space<vmem>>, vector<64x9xbf16>
    %c0_10 = arith.constant 0 : index
    %c0_11 = arith.constant 0 : index
    %10 = vector.load %arg3[%c0_10, %c0_11] : memref<8x9xf32, #tpu.memory_space<vmem>>, vector<8x9xf32>
    %11 = arith.truncf %10 : vector<8x9xf32> to vector<8x9xbf16>
    %cst_12 = arith.constant dense<0.000000e+00> : vector<64x8xf32>
    %12 = tpu.matmul %9, %11, %cst_12 {dimension_numbers = #tpu.dot_dimension_numbers<[1], [1], [0], [0], [0, 0, 1, 0], [], []>} : vector<64x9xbf16>, vector<8x9xbf16>, vector<64x8xf32> -> vector<64x8xf32>
    %13 = arith.addf %8, %12 : vector<64x8xf32>
    %c0_13 = arith.constant 0 : index
    %c0_14 = arith.constant 0 : index
    %14 = vector.load %arg9[%c0_13, %c0_14] : memref<64x1xf32, #tpu.memory_space<vmem>>, vector<64x1xf32>
    %15 = vector.broadcast %14 : vector<64x1xf32> to vector<64x8xf32>
    %16 = arith.addf %13, %15 : vector<64x8xf32>
    %cst_15 = arith.constant 0.000000e+00 : f32
    %17 = vector.broadcast %cst_15 : f32 to vector<64x8xf32>
    %18 = arith.maximumf %16, %17 : vector<64x8xf32>
    %c0_16 = arith.constant 0 : index
    %c0_17 = arith.constant 0 : index
    %19 = vector.load %arg7[%c0_16, %c0_17] : memref<64x64xbf16, #tpu.memory_space<vmem>>, vector<64x64xbf16>
    %20 = arith.truncf %18 : vector<64x8xf32> to vector<64x8xbf16>
    %cst_18 = arith.constant dense<0.000000e+00> : vector<64x8xf32>
    %21 = tpu.matmul %19, %20, %cst_18 {dimension_numbers = #tpu.dot_dimension_numbers<[1], [0], [0], [1], [0, 0, 1, 1], [], []>} : vector<64x64xbf16>, vector<64x8xbf16>, vector<64x8xf32> -> vector<64x8xf32>
    %c0_19 = arith.constant 0 : index
    %c0_20 = arith.constant 0 : index
    %22 = vector.load %arg10[%c0_19, %c0_20] : memref<64x1xf32, #tpu.memory_space<vmem>>, vector<64x1xf32>
    %23 = vector.broadcast %22 : vector<64x1xf32> to vector<64x8xf32>
    %24 = arith.addf %21, %23 : vector<64x8xf32>
    %cst_21 = arith.constant 0.000000e+00 : f32
    %25 = vector.broadcast %cst_21 : f32 to vector<64x8xf32>
    %26 = arith.maximumf %24, %25 : vector<64x8xf32>
    %c0_22 = arith.constant 0 : index
    %c0_23 = arith.constant 0 : index
    %27 = vector.load %arg8[%c0_22, %c0_23] : memref<8x64xbf16, #tpu.memory_space<vmem>>, vector<8x64xbf16>
    %28 = arith.truncf %26 : vector<64x8xf32> to vector<64x8xbf16>
    %cst_24 = arith.constant dense<0.000000e+00> : vector<8x8xf32>
    %29 = tpu.matmul %27, %28, %cst_24 {dimension_numbers = #tpu.dot_dimension_numbers<[1], [0], [0], [1], [0, 0, 1, 1], [], []>} : vector<8x64xbf16>, vector<64x8xbf16>, vector<8x8xf32> -> vector<8x8xf32>
    %c0_25 = arith.constant 0 : index
    %c0_26 = arith.constant 0 : index
    %30 = vector.load %arg11[%c0_25, %c0_26] : memref<8x1xf32, #tpu.memory_space<vmem>>, vector<8x1xf32>
    %31 = vector.broadcast %30 : vector<8x1xf32> to vector<8x8xf32>
    %32 = arith.addf %29, %31 : vector<8x8xf32>
    %33 = vector.extract_strided_slice %32 {offsets = [0, 0], sizes = [2, 8], strides = [1, 1]} : vector<8x8xf32> to vector<2x8xf32>
    %c0_27 = arith.constant 0 : index
    %c0_28 = arith.constant 0 : index
    %34 = vector.load %arg12[%c0_27, %c0_28] : memref<2x8xf32, #tpu.memory_space<vmem>>, vector<2x8xf32>
    tpu.vector_store %arg12[%c0_27, %c0_28], %33 {strides = array<i32>} : memref<2x8xf32, #tpu.memory_space<vmem>>, vector<2x8xf32>,
    return
  }
  func.func @transform_0(%arg0: i32) -> (i32, i32) {
    %c0_i32 = arith.constant 0 : i32
    %c0_i32_0 = arith.constant 0 : i32
    return %arg0, %c0_i32 : i32, i32
  }
  func.func @transform_1(%arg0: i32) -> (i32, i32) {
    %c0_i32 = arith.constant 0 : i32
    %c0_i32_0 = arith.constant 0 : i32
    return %arg0, %c0_i32 : i32, i32
  }
  func.func @transform_2(%arg0: i32) -> (i32, i32) {
    %c0_i32 = arith.constant 0 : i32
    %c0_i32_0 = arith.constant 0 : i32
    return %arg0, %c0_i32 : i32, i32
  }
  func.func @transform_3(%arg0: i32) -> (i32, i32) {
    %c0_i32 = arith.constant 0 : i32
    %c0_i32_0 = arith.constant 0 : i32
    %c0_i32_1 = arith.constant 0 : i32
    return %c0_i32, %c0_i32_0 : i32, i32
  }
  func.func @transform_4(%arg0: i32) -> (i32, i32) {
    %c0_i32 = arith.constant 0 : i32
    %c0_i32_0 = arith.constant 0 : i32
    %c0_i32_1 = arith.constant 0 : i32
    return %c0_i32, %c0_i32_0 : i32, i32
  }
  func.func @transform_5(%arg0: i32) -> (i32, i32) {
    %c0_i32 = arith.constant 0 : i32
    %c0_i32_0 = arith.constant 0 : i32
    %c0_i32_1 = arith.constant 0 : i32
    return %c0_i32, %c0_i32_0 : i32, i32
  }
  func.func @transform_6(%arg0: i32) -> (i32, i32) {
    %c0_i32 = arith.constant 0 : i32
    %c0_i32_0 = arith.constant 0 : i32
    %c0_i32_1 = arith.constant 0 : i32
    return %c0_i32, %c0_i32_0 : i32, i32
  }
  func.func @transform_7(%arg0: i32) -> (i32, i32) {
    %c0_i32 = arith.constant 0 : i32
    %c0_i32_0 = arith.constant 0 : i32
    %c0_i32_1 = arith.constant 0 : i32
    return %c0_i32, %c0_i32_0 : i32, i32
  }
  func.func @transform_8(%arg0: i32) -> (i32, i32) {
    %c0_i32 = arith.constant 0 : i32
    %c0_i32_0 = arith.constant 0 : i32
    %c0_i32_1 = arith.constant 0 : i32
    return %c0_i32, %c0_i32_0 : i32, i32
  }
  func.func @transform_9(%arg0: i32) -> (i32, i32) {
    %c0_i32 = arith.constant 0 : i32
    %c0_i32_0 = arith.constant 0 : i32
    %c0_i32_1 = arith.constant 0 : i32
    return %c0_i32, %c0_i32_0 : i32, i32
  }
  func.func @transform_10(%arg0: i32) -> (i32, i32) {
    %c0_i32 = arith.constant 0 : i32
    %c0_i32_0 = arith.constant 0 : i32
    %c0_i32_1 = arith.constant 0 : i32
    return %c0_i32, %c0_i32_0 : i32, i32
  }
  func.func @transform_11(%arg0: i32) -> (i32, i32) {
    %c0_i32 = arith.constant 0 : i32
    %c0_i32_0 = arith.constant 0 : i32
    return %c0_i32, %arg0 : i32, i32
  }
}

</mosaic_0001>

<llo_original>
// kernel: tpu_custom_call.1
$region0: #{tpu_custom_call.1}
  #allocation0 [shape = 'u32[]', space=smem, size = 0x4, offset = 0x4, fixed_abs, tag = 'smem constant byte address 0x4 - core index']
  #allocation1 [shape = 'u32[144,128]{1,0:T(1,128)}', space=vmem, size = 0x12000, scoped, tag = 'internal scratch']
  %s0 = inlined_call_operand.vmem [shape: f32[8,17], index: 0, kind: input, shape index: {}]
  %s1 = inlined_call_operand.vmem [shape: f32[8,6], index: 1, kind: input, shape index: {}]
  %s2 = inlined_call_operand.vmem [shape: f32[8,9], index: 2, kind: input, shape index: {}]
  %s3 = inlined_call_operand.vmem [shape: bf16[64,17], index: 3, kind: input, shape index: {}]
  %s4 = inlined_call_operand.vmem [shape: bf16[64,6], index: 4, kind: input, shape index: {}]
  %s5 = inlined_call_operand.vmem [shape: bf16[64,9], index: 5, kind: input, shape index: {}]
  %s6 = inlined_call_operand.vmem [shape: bf16[64,64], index: 6, kind: input, shape index: {}]
  %s7 = inlined_call_operand.vmem [shape: bf16[8,64], index: 7, kind: input, shape index: {}]
  %s8 = inlined_call_operand.vmem [shape: f32[64,1], index: 8, kind: input, shape index: {}]
  %s9 = inlined_call_operand.vmem [shape: f32[64,1], index: 9, kind: input, shape index: {}]
  %s10 = inlined_call_operand.vmem [shape: f32[8,1], index: 10, kind: input, shape index: {}]
  %s11 = inlined_call_operand.hbm [shape: f32[2,8], index: 11, kind: output, shape index: {}]
  %s12 = sld [smem:[#allocation0]]
  $region54: #{tpu_custom_call.1} parent=0
    _
  %s14 = ssub.s32 1, %s12
  %s15 = scalar_select 0, %s14, %s12
  $region1: #{tpu_custom_call.1} parent=0
    #allocation2 [shape = 'u8[1024]{0}', space=vmem, size = 0x400, scoped, tag = 'output window, operand 0, single buffered']
    #allocation3 [shape = 's32[1]{0}', space=sflag, size = 0x4, scoped, tag = 'scoped memory for tpu_custom_call.1']
    %16 = vsyncpa [#allocation3], 0
    // Predicated region
    $region2: #{tpu_custom_call.1} parent=1 // pred_check
      _
    $region3: #{tpu_custom_call.1} parent=1 // pred_check_branch
      %18 = sbr.rel (0) target = $region5
    $region4: #{tpu_custom_call.1} parent=1 // pred_region
      _
    $region5: #{tpu_custom_call.1} parent=1 // pred_fallthru
      _
    // Predicated region
    $region6: #{tpu_custom_call.1} parent=1 // pred_check
      _
    $region7: #{tpu_custom_call.1} parent=1 // pred_check_branch
      %20 = sbr.rel (0) target = $region9
    $region8: #{tpu_custom_call.1} parent=1 // pred_region
      _
    $region9: #{tpu_custom_call.1} parent=1 // pred_fallthru
      _
    // Predicated region
    $region10: #{tpu_custom_call.1} parent=1 // pred_check
      _
    $region11: #{tpu_custom_call.1} parent=1 // pred_check_branch
      %22 = sbr.rel (0) target = $region13
    $region12: #{tpu_custom_call.1} parent=1 // pred_region
      _
    $region13: #{tpu_custom_call.1} parent=1 // pred_fallthru
      _
    // Predicated region
    $region14: #{tpu_custom_call.1} parent=1 // pred_check
      _
    $region15: #{tpu_custom_call.1} parent=1 // pred_check_branch
      %24 = sbr.rel (0) target = $region17
    $region16: #{tpu_custom_call.1} parent=1 // pred_region
      _
    $region17: #{tpu_custom_call.1} parent=1 // pred_fallthru
      _
    // Predicated region
    $region18: #{tpu_custom_call.1} parent=1 // pred_check
      _
    $region19: #{tpu_custom_call.1} parent=1 // pred_check_branch
      %26 = sbr.rel (0) target = $region21
    $region20: #{tpu_custom_call.1} parent=1 // pred_region
      _
    $region21: #{tpu_custom_call.1} parent=1 // pred_fallthru
      _
    // Predicated region
    $region22: #{tpu_custom_call.1} parent=1 // pred_check
      _
    $region23: #{tpu_custom_call.1} parent=1 // pred_check_branch
      %28 = sbr.rel (0) target = $region25
    $region24: #{tpu_custom_call.1} parent=1 // pred_region
      _
    $region25: #{tpu_custom_call.1} parent=1 // pred_fallthru
      _
    // Predicated region
    $region26: #{tpu_custom_call.1} parent=1 // pred_check
      _
    $region27: #{tpu_custom_call.1} parent=1 // pred_check_branch
      %30 = sbr.rel (0) target = $region29
    $region28: #{tpu_custom_call.1} parent=1 // pred_region
      _
    $region29: #{tpu_custom_call.1} parent=1 // pred_fallthru
      _
    // Predicated region
    $region30: #{tpu_custom_call.1} parent=1 // pred_check
      _
    $region31: #{tpu_custom_call.1} parent=1 // pred_check_branch
      %32 = sbr.rel (0) target = $region33
    $region32: #{tpu_custom_call.1} parent=1 // pred_region
      _
    $region33: #{tpu_custom_call.1} parent=1 // pred_fallthru
      _
    // Predicated region
    $region34: #{tpu_custom_call.1} parent=1 // pred_check
      _
    $region35: #{tpu_custom_call.1} parent=1 // pred_check_branch
      %34 = sbr.rel (0) target = $region37
    $region36: #{tpu_custom_call.1} parent=1 // pred_region
      _
    $region37: #{tpu_custom_call.1} parent=1 // pred_fallthru
      _
    // Predicated region
    $region38: #{tpu_custom_call.1} parent=1 // pred_check
      _
    $region39: #{tpu_custom_call.1} parent=1 // pred_check_branch
      %36 = sbr.rel (0) target = $region41
    $region40: #{tpu_custom_call.1} parent=1 // pred_region
      _
    $region41: #{tpu_custom_call.1} parent=1 // pred_fallthru
      _
    // Predicated region
    $region42: #{tpu_custom_call.1} parent=1 // pred_check
      _
    $region43: #{tpu_custom_call.1} parent=1 // pred_check_branch
      %38 = sbr.rel (0) target = $region45
    $region44: #{tpu_custom_call.1} parent=1 // pred_region
      _
    $region45: #{tpu_custom_call.1} parent=1 // pred_fallthru
      _
    %v40 = vld [vmem:[%s3] sm:$0xf]
    %v41 = vld [vmem:[%s3 + $0x4] sm:$0xf]
    %v42 = vld [vmem:[%s3 + $0x8] sm:$0xf]
    %v43 = vld [vmem:[%s3 + $0xc] sm:$0xf]
    %v44 = vld [vmem:[%s3 + $0x10] sm:$0xf]
    %v45 = vld [vmem:[%s3 + $0x14] sm:$0xf]
    %v46 = vld [vmem:[%s3 + $0x18] sm:$0xf]
    %v47 = vld [vmem:[%s3 + $0x1c] sm:$0xf]
    %v48 = vld [vmem:[%s0] sm:$0xff]
    %v49 = vpack.c.bf16 %v48, %v48
    %v50 = vld [vmem:[%s4] sm:$0xf]
    %v51 = vld [vmem:[%s4 + $0x4] sm:$0xf]
    %v52 = vld [vmem:[%s4 + $0x8] sm:$0xf]
    %v53 = vld [vmem:[%s4 + $0xc] sm:$0xf]
    %v54 = vld [vmem:[%s4 + $0x10] sm:$0xf]
    %v55 = vld [vmem:[%s4 + $0x14] sm:$0xf]
    %v56 = vld [vmem:[%s4 + $0x18] sm:$0xf]
    %v57 = vld [vmem:[%s4 + $0x1c] sm:$0xf]
    %v58 = vld [vmem:[%s1] sm:$0xff]
    %v59 = vpack.c.bf16 %v58, %v58
    %v68 = vunpack.c.l.b16 %v50
    %v69 = vunpack.c.l.b16 %v51
    %v70 = vunpack.c.l.b16 %v52
    %v71 = vunpack.c.l.b16 %v53
    %v72 = vunpack.c.l.b16 %v54
    %v73 = vunpack.c.l.b16 %v55
    %v74 = vunpack.c.l.b16 %v56
    %v75 = vunpack.c.l.b16 %v57
    %v76 = vpack.c.b16 %v69, %v68
    %v77 = vpack.c.b16 %v71, %v70
    %v78 = vpack.c.b16 %v73, %v72
    %v79 = vpack.c.b16 %v75, %v74
    %vm80 = vcmask 48128
    %v82 = vsel %vm80, %v76, 0
    %v85 = vsel %vm80, %v77, 0
    %v88 = vsel %vm80, %v78, 0
    %v91 = vsel %vm80, %v79, 0
    %v94 = vsel %vm80, %v59, 0
    %96 = vmatprep.subr.bf16.mxu0 0
    %97 = vmatpush1.bf16.xpose.msra.mxu0 %v94
    %98 = vmatprep.subr.bf16.mxu0 0
    %99 = vmatpush1.bf16.xpose.msra.mxu0 0
    %100 = vmatprep.subr.bf16.mxu0 0
    %101 = vmatpush1.bf16.xpose.msra.mxu0 0
    %102 = vmatprep.subr.bf16.mxu0 0
    %103 = vmatpush1.bf16.xpose.msra.mxu0 0
    %104 = vmatprep.subr.bf16.mxu0 0
    %105 = vmatpush1.bf16.xpose.msra.mxu0 0
    %106 = vmatprep.subr.bf16.mxu0 0
    %107 = vmatpush1.bf16.xpose.msra.mxu0 0
    %108 = vmatprep.subr.bf16.mxu0 0
    %109 = vmatpush1.bf16.xpose.msra.mxu0 0
    %110 = vmatprep.subr.bf16.mxu0 0
    %111 = vmatpush1.bf16.xpose.msra.mxu0 0
    %112 = vmatprep.subr.bf16.mxu0 0
    %113 = vmatpush1.bf16.xpose.msra.mxu0 0
    %114 = vmatprep.subr.bf16.mxu0 0
    %115 = vmatpush1.bf16.xpose.msra.mxu0 0
    %116 = vmatprep.subr.bf16.mxu0 0
    %117 = vmatpush1.bf16.xpose.msra.mxu0 0
    %118 = vmatprep.subr.bf16.mxu0 0
    %119 = vmatpush1.bf16.xpose.msra.mxu0 0
    %120 = vmatprep.subr.bf16.mxu0 0
    %121 = vmatpush1.bf16.xpose.msra.mxu0 0
    %122 = vmatprep.subr.bf16.mxu0 0
    %123 = vmatpush1.bf16.xpose.msra.mxu0 0
    %124 = vmatprep.subr.bf16.mxu0 0
    %125 = vmatpush1.bf16.xpose.msra.mxu0 0
    %126 = vmatprep.subr.bf16.mxu0 0
    %127 = vmatpush1.bf16.xpose.msra.mxu0 0
    %128 = vmatprep.mubr.bf16.mxu0 0
    %129 = vmatmul.mubr.bf16.gmra.mrb[0].mxu0 %v82
    %v130 = vpop.f32.mrb[0].mxu0
    %v131 = vadd.f32 0.0, %v130
    %v132 = vpop.f32.mrb[0].mxu0
    %v133 = vpop.f32.mrb[0].mxu0
    %v134 = vadd.f32 0.0, %v133
    %v135 = vpop.f32.mrb[0].mxu0
    %136 = vmatprep.mubr.bf16.mxu0 0
    %137 = vmatmul.mubr.bf16.gmra.mrb[0].mxu0 %v85
    %v138 = vpop.f32.mrb[0].mxu0
    %v139 = vadd.f32 0.0, %v138
    %v140 = vpop.f32.mrb[0].mxu0
    %v141 = vpop.f32.mrb[0].mxu0
    %v142 = vadd.f32 0.0, %v141
    %v143 = vpop.f32.mrb[0].mxu0
    %144 = vmatprep.mubr.bf16.mxu0 0
    %145 = vmatmul.mubr.bf16.gmra.mrb[0].mxu0 %v88
    %v146 = vpop.f32.mrb[0].mxu0
    %v147 = vadd.f32 0.0, %v146
    %v148 = vpop.f32.mrb[0].mxu0
    %v149 = vpop.f32.mrb[0].mxu0
    %v150 = vadd.f32 0.0, %v149
    %v151 = vpop.f32.mrb[0].mxu0
    %152 = vmatprep.mubr.bf16.mxu0 0
    %153 = vmatmul.mubr.bf16.gmra.mrb[0].mxu0 %v91
    %v154 = vpop.f32.mrb[0].mxu0
    %v155 = vadd.f32 0.0, %v154
    %v156 = vpop.f32.mrb[0].mxu0
    %v157 = vpop.f32.mrb[0].mxu0
    %v158 = vadd.f32 0.0, %v157
    %v159 = vpop.f32.mrb[0].mxu0
    %160 = vdwg.mxu0
    %v169 = vunpack.c.l.b16 %v40
    %v170 = vunpack.c.l.b16 %v41
    %v171 = vunpack.c.l.b16 %v42
    %v172 = vunpack.c.l.b16 %v43
    %v173 = vunpack.c.l.b16 %v44
    %v174 = vunpack.c.l.b16 %v45
    %v175 = vunpack.c.l.b16 %v46
    %v176 = vunpack.c.l.b16 %v47
    %v177 = vpack.c.b16 %v170, %v169
    %v178 = vpack.c.b16 %v172, %v171
    %v179 = vpack.c.b16 %v174, %v173
    %v180 = vpack.c.b16 %v176, %v175
    %vm181 = vcmask 138240
    %v183 = vsel %vm181, %v177, 0
    %v186 = vsel %vm181, %v178, 0
    %v189 = vsel %vm181, %v179, 0
    %v192 = vsel %vm181, %v180, 0
    %v195 = vsel %vm181, %v49, 0
    %197 = vmatprep.subr.bf16.mxu0 0
    %198 = vmatpush1.bf16.xpose.msra.mxu0 %v195
    %199 = vmatprep.subr.bf16.mxu0 0
    %200 = vmatpush1.bf16.xpose.msra.mxu0 0
    %201 = vmatprep.subr.bf16.mxu0 0
    %202 = vmatpush1.bf16.xpose.msra.mxu0 0
    %203 = vmatprep.subr.bf16.mxu0 0
    %204 = vmatpush1.bf16.xpose.msra.mxu0 0
    %205 = vmatprep.subr.bf16.mxu0 0
    %206 = vmatpush1.bf16.xpose.msra.mxu0 0
    %207 = vmatprep.subr.bf16.mxu0 0
    %208 = vmatpush1.bf16.xpose.msra.mxu0 0
    %209 = vmatprep.subr.bf16.mxu0 0
    %210 = vmatpush1.bf16.xpose.msra.mxu0 0
    %211 = vmatprep.subr.bf16.mxu0 0
    %212 = vmatpush1.bf16.xpose.msra.mxu0 0
    %213 = vmatprep.subr.bf16.mxu0 0
    %214 = vmatpush1.bf16.xpose.msra.mxu0 0
    %215 = vmatprep.subr.bf16.mxu0 0
    %216 = vmatpush1.bf16.xpose.msra.mxu0 0
    %217 = vmatprep.subr.bf16.mxu0 0
    %218 = vmatpush1.bf16.xpose.msra.mxu0 0
    %219 = vmatprep.subr.bf16.mxu0 0
    %220 = vmatpush1.bf16.xpose.msra.mxu0 0
    %221 = vmatprep.subr.bf16.mxu0 0
    %222 = vmatpush1.bf16.xpose.msra.mxu0 0
    %223 = vmatprep.subr.bf16.mxu0 0
    %224 = vmatpush1.bf16.xpose.msra.mxu0 0
    %225 = vmatprep.subr.bf16.mxu0 0
    %226 = vmatpush1.bf16.xpose.msra.mxu0 0
    %227 = vmatprep.subr.bf16.mxu0 0
    %228 = vmatpush1.bf16.xpose.msra.mxu0 0
    %229 = vmatprep.mubr.bf16.mxu0 0
    %230 = vmatmul.mubr.bf16.gmra.mrb[0].mxu0 %v183
    %v231 = vpop.f32.mrb[0].mxu0
    %v232 = vadd.f32 %v131, %v231
    %v233 = vpop.f32.mrb[0].mxu0
    %v234 = vpop.f32.mrb[0].mxu0
    %v235 = vadd.f32 %v134, %v234
    %v236 = vpop.f32.mrb[0].mxu0
    %237 = vmatprep.mubr.bf16.mxu0 0
    %238 = vmatmul.mubr.bf16.gmra.mrb[0].mxu0 %v186
    %v239 = vpop.f32.mrb[0].mxu0
    %v240 = vadd.f32 %v139, %v239
    %v241 = vpop.f32.mrb[0].mxu0
    %v242 = vpop.f32.mrb[0].mxu0
    %v243 = vadd.f32 %v142, %v242
    %v244 = vpop.f32.mrb[0].mxu0
    %245 = vmatprep.mubr.bf16.mxu0 0
    %246 = vmatmul.mubr.bf16.gmra.mrb[0].mxu0 %v189
    %v247 = vpop.f32.mrb[0].mxu0
    %v248 = vadd.f32 %v147, %v247
    %v249 = vpop.f32.mrb[0].mxu0
    %v250 = vpop.f32.mrb[0].mxu0
    %v251 = vadd.f32 %v150, %v250
    %v252 = vpop.f32.mrb[0].mxu0
    %253 = vmatprep.mubr.bf16.mxu0 0
    %254 = vmatmul.mubr.bf16.gmra.mrb[0].mxu0 %v192
    %v255 = vpop.f32.mrb[0].mxu0
    %v256 = vadd.f32 %v155, %v255
    %v257 = vpop.f32.mrb[0].mxu0
    %v258 = vpop.f32.mrb[0].mxu0
    %v259 = vadd.f32 %v158, %v258
    %v260 = vpop.f32.mrb[0].mxu0
    %261 = vdwg.mxu0
    %v262 = vld [vmem:[%s5] sm:$0xf]
    %v263 = vld [vmem:[%s5 + $0x4] sm:$0xf]
    %v264 = vld [vmem:[%s5 + $0x8] sm:$0xf]
    %v265 = vld [vmem:[%s5 + $0xc] sm:$0xf]
    %v266 = vld [vmem:[%s5 + $0x10] sm:$0xf]
    %v267 = vld [vmem:[%s5 + $0x14] sm:$0xf]
    %v268 = vld [vmem:[%s5 + $0x18] sm:$0xf]
    %v269 = vld [vmem:[%s5 + $0x1c] sm:$0xf]
    %v270 = vld [vmem:[%s2] sm:$0xff]
    %v271 = vpack.c.bf16 %v270, %v270
    %v280 = vunpack.c.l.b16 %v262
    %v281 = vunpack.c.l.b16 %v263
    %v282 = vunpack.c.l.b16 %v264
    %v283 = vunpack.c.l.b16 %v265
    %v284 = vunpack.c.l.b16 %v266
    %v285 = vunpack.c.l.b16 %v267
    %v286 = vunpack.c.l.b16 %v268
    %v287 = vunpack.c.l.b16 %v269
    %v288 = vpack.c.b16 %v281, %v280
    %v289 = vpack.c.b16 %v283, %v282
    %v290 = vpack.c.b16 %v285, %v284
    %v291 = vpack.c.b16 %v287, %v286
    %vm292 = vcmask 72704
    %v294 = vsel %vm292, %v288, 0
    %v297 = vsel %vm292, %v289, 0
    %v300 = vsel %vm292, %v290, 0
    %v303 = vsel %vm292, %v291, 0
    %v306 = vsel %vm292, %v271, 0
    %308 = vmatprep.subr.bf16.mxu0 0
    %309 = vmatpush1.bf16.xpose.msra.mxu0 %v306
    %310 = vmatprep.subr.bf16.mxu0 0
    %311 = vmatpush1.bf16.xpose.msra.mxu0 0
    %312 = vmatprep.subr.bf16.mxu0 0
    %313 = vmatpush1.bf16.xpose.msra.mxu0 0
    %314 = vmatprep.subr.bf16.mxu0 0
    %315 = vmatpush1.bf16.xpose.msra.mxu0 0
    %316 = vmatprep.subr.bf16.mxu0 0
    %317 = vmatpush1.bf16.xpose.msra.mxu0 0
    %318 = vmatprep.subr.bf16.mxu0 0
    %319 = vmatpush1.bf16.xpose.msra.mxu0 0
    %320 = vmatprep.subr.bf16.mxu0 0
    %321 = vmatpush1.bf16.xpose.msra.mxu0 0
    %322 = vmatprep.subr.bf16.mxu0 0
    %323 = vmatpush1.bf16.xpose.msra.mxu0 0
    %324 = vmatprep.subr.bf16.mxu0 0
    %325 = vmatpush1.bf16.xpose.msra.mxu0 0
    %326 = vmatprep.subr.bf16.mxu0 0
    %327 = vmatpush1.bf16.xpose.msra.mxu0 0
    %328 = vmatprep.subr.bf16.mxu0 0
    %329 = vmatpush1.bf16.xpose.msra.mxu0 0
    %330 = vmatprep.subr.bf16.mxu0 0
    %331 = vmatpush1.bf16.xpose.msra.mxu0 0
    %332 = vmatprep.subr.bf16.mxu0 0
    %333 = vmatpush1.bf16.xpose.msra.mxu0 0
    %334 = vmatprep.subr.bf16.mxu0 0
    %335 = vmatpush1.bf16.xpose.msra.mxu0 0
    %336 = vmatprep.subr.bf16.mxu0 0
    %337 = vmatpush1.bf16.xpose.msra.mxu0 0
    %338 = vmatprep.subr.bf16.mxu0 0
    %339 = vmatpush1.bf16.xpose.msra.mxu0 0
    %340 = vmatprep.mubr.bf16.mxu0 0
    %341 = vmatmul.mubr.bf16.gmra.mrb[0].mxu0 %v294
    %v342 = vpop.f32.mrb[0].mxu0
    %v343 = vadd.f32 0.0, %v342
    %v344 = vpop.f32.mrb[0].mxu0
    %v345 = vpop.f32.mrb[0].mxu0
    %v346 = vadd.f32 0.0, %v345
    %v347 = vpop.f32.mrb[0].mxu0
    %348 = vmatprep.mubr.bf16.mxu0 0
    %349 = vmatmul.mubr.bf16.gmra.mrb[0].mxu0 %v297
    %v350 = vpop.f32.mrb[0].mxu0
    %v351 = vadd.f32 0.0, %v350
    %v352 = vpop.f32.mrb[0].mxu0
    %v353 = vpop.f32.mrb[0].mxu0
    %v354 = vadd.f32 0.0, %v353
    %v355 = vpop.f32.mrb[0].mxu0
    %356 = vmatprep.mubr.bf16.mxu0 0
    %357 = vmatmul.mubr.bf16.gmra.mrb[0].mxu0 %v300
    %v358 = vpop.f32.mrb[0].mxu0
    %v359 = vadd.f32 0.0, %v358
    %v360 = vpop.f32.mrb[0].mxu0
    %v361 = vpop.f32.mrb[0].mxu0
    %v362 = vadd.f32 0.0, %v361
    %v363 = vpop.f32.mrb[0].mxu0
    %364 = vmatprep.mubr.bf16.mxu0 0
    %365 = vmatmul.mubr.bf16.gmra.mrb[0].mxu0 %v303
    %v366 = vpop.f32.mrb[0].mxu0
    %v367 = vadd.f32 0.0, %v366
    %v368 = vpop.f32.mrb[0].mxu0
    %v369 = vpop.f32.mrb[0].mxu0
    %v370 = vadd.f32 0.0, %v369
    %v371 = vpop.f32.mrb[0].mxu0
    %372 = vdwg.mxu0
    %v373 = vadd.f32 %v232, %v343
    %v374 = vadd.f32 %v235, %v346
    %v375 = vadd.f32 %v240, %v351
    %v376 = vadd.f32 %v243, %v354
    %v377 = vadd.f32 %v248, %v359
    %v378 = vadd.f32 %v251, %v362
    %v379 = vadd.f32 %v256, %v367
    %v380 = vadd.f32 %v259, %v370
    %v381 = vld [vmem:[%s8] sm:$0xff]
    %v382 = vld [vmem:[%s8 + $0x8] sm:$0xff]
    %v383 = vld [vmem:[%s8 + $0x10] sm:$0xff]
    %v384 = vld [vmem:[%s8 + $0x18] sm:$0xff]
    %v385 = vld [vmem:[%s8 + $0x20] sm:$0xff]
    %v386 = vld [vmem:[%s8 + $0x28] sm:$0xff]
    %v387 = vld [vmem:[%s8 + $0x30] sm:$0xff]
    %v388 = vld [vmem:[%s8 + $0x38] sm:$0xff]
    %390 = vset.pattern.permute.xlu0 0
    %391 = vperm.xlu0 %390, %v381
    %v392 = vpop.permute.xlu0 %391
    %395 = vset.pattern.permute.xlu0 0
    %396 = vperm.xlu0 %395, %v382
    %v397 = vpop.permute.xlu0 %396
    %400 = vset.pattern.permute.xlu0 0
    %401 = vperm.xlu0 %400, %v383
    %v402 = vpop.permute.xlu0 %401
    %405 = vset.pattern.permute.xlu0 0
    %406 = vperm.xlu0 %405, %v384
    %v407 = vpop.permute.xlu0 %406
    %410 = vset.pattern.permute.xlu0 0
    %411 = vperm.xlu0 %410, %v385
    %v412 = vpop.permute.xlu0 %411
    %415 = vset.pattern.permute.xlu0 0
    %416 = vperm.xlu0 %415, %v386
    %v417 = vpop.permute.xlu0 %416
    %420 = vset.pattern.permute.xlu0 0
    %421 = vperm.xlu0 %420, %v387
    %v422 = vpop.permute.xlu0 %421
    %425 = vset.pattern.permute.xlu0 0
    %426 = vperm.xlu0 %425, %v388
    %v427 = vpop.permute.xlu0 %426
    %v429 = vadd.f32 %v373, %v392
    %v430 = vadd.f32 %v374, %v397
    %v431 = vadd.f32 %v375, %v402
    %v432 = vadd.f32 %v376, %v407
    %v433 = vadd.f32 %v377, %v412
    %v434 = vadd.f32 %v378, %v417
    %v435 = vadd.f32 %v379, %v422
    %v436 = vadd.f32 %v380, %v427
    %v437 = vmax.f32 %v429, 0.0
    %v438 = vmax.f32 %v430, 0.0
    %v439 = vmax.f32 %v431, 0.0
    %v440 = vmax.f32 %v432, 0.0
    %v441 = vmax.f32 %v433, 0.0
    %v442 = vmax.f32 %v434, 0.0
    %v443 = vmax.f32 %v435, 0.0
    %v444 = vmax.f32 %v436, 0.0
    %v445 = vld [vmem:[%s6] sm:$0xf]
    %v446 = vld [vmem:[%s6 + $0x4] sm:$0xf]
    %v447 = vld [vmem:[%s6 + $0x8] sm:$0xf]
    %v448 = vld [vmem:[%s6 + $0xc] sm:$0xf]
    %v449 = vld [vmem:[%s6 + $0x10] sm:$0xf]
    %v450 = vld [vmem:[%s6 + $0x14] sm:$0xf]
    %v451 = vld [vmem:[%s6 + $0x18] sm:$0xf]
    %v452 = vld [vmem:[%s6 + $0x1c] sm:$0xf]
    %v453 = vpack.c.bf16 %v438, %v437
    %v454 = vpack.c.bf16 %v440, %v439
    %v455 = vpack.c.bf16 %v442, %v441
    %v456 = vpack.c.bf16 %v444, %v443
    %v457 = vld [vmem:[%s9] sm:$0xff]
    %v458 = vld [vmem:[%s9 + $0x8] sm:$0xff]
    %v459 = vld [vmem:[%s9 + $0x10] sm:$0xff]
    %v460 = vld [vmem:[%s9 + $0x18] sm:$0xff]
    %v461 = vld [vmem:[%s9 + $0x20] sm:$0xff]
    %v462 = vld [vmem:[%s9 + $0x28] sm:$0xff]
    %v463 = vld [vmem:[%s9 + $0x30] sm:$0xff]
    %v464 = vld [vmem:[%s9 + $0x38] sm:$0xff]
    %466 = vset.pattern.permute.xlu0 0
    %467 = vperm.xlu0 %466, %v457
    %v468 = vpop.permute.xlu0 %467
    %471 = vset.pattern.permute.xlu0 0
    %472 = vperm.xlu0 %471, %v458
    %v473 = vpop.permute.xlu0 %472
    %476 = vset.pattern.permute.xlu0 0
    %477 = vperm.xlu0 %476, %v459
    %v478 = vpop.permute.xlu0 %477
    %481 = vset.pattern.permute.xlu0 0
    %482 = vperm.xlu0 %481, %v460
    %v483 = vpop.permute.xlu0 %482
    %486 = vset.pattern.permute.xlu0 0
    %487 = vperm.xlu0 %486, %v461
    %v488 = vpop.permute.xlu0 %487
    %491 = vset.pattern.permute.xlu0 0
    %492 = vperm.xlu0 %491, %v462
    %v493 = vpop.permute.xlu0 %492
    %496 = vset.pattern.permute.xlu0 0
    %497 = vperm.xlu0 %496, %v463
    %v498 = vpop.permute.xlu0 %497
    %501 = vset.pattern.permute.xlu0 0
    %502 = vperm.xlu0 %501, %v464
    %v503 = vpop.permute.xlu0 %502
    %v513 = vunpack.c.l.b16 %v445
    %v514 = vunpack.c.l.b16 %v446
    %v515 = vunpack.c.l.b16 %v447
    %v516 = vunpack.c.l.b16 %v448
    %v517 = vunpack.c.l.b16 %v449
    %v518 = vunpack.c.l.b16 %v450
    %v519 = vunpack.c.l.b16 %v451
    %v520 = vunpack.c.l.b16 %v452
    %v521 = vpack.c.b16 %v514, %v513
    %v522 = vpack.c.b16 %v516, %v515
    %v523 = vpack.c.b16 %v518, %v517
    %v524 = vpack.c.b16 %v520, %v519
    %vm525 = vcmask 523264
    %v527 = vsel %vm525, %v521, 0
    %v530 = vsel %vm525, %v522, 0
    %v533 = vsel %vm525, %v523, 0
    %v536 = vsel %vm525, %v524, 0
    %538 = vmatprep.subr.bf16.mxu0 0
    %539 = vmatpush1.bf16.msra.mxu0 %v453
    %540 = vmatprep.subr.bf16.mxu0 0
    %541 = vmatpush1.bf16.msra.mxu0 %v454
    %542 = vmatprep.subr.bf16.mxu0 0
    %543 = vmatpush1.bf16.msra.mxu0 %v455
    %544 = vmatprep.subr.bf16.mxu0 0
    %545 = vmatpush1.bf16.msra.mxu0 %v456
    %546 = vmatprep.subr.bf16.mxu0 0
    %547 = vmatpush1.bf16.msra.mxu0 0
    %548 = vmatprep.subr.bf16.mxu0 0
    %549 = vmatpush1.bf16.msra.mxu0 0
    %550 = vmatprep.subr.bf16.mxu0 0
    %551 = vmatpush1.bf16.msra.mxu0 0
    %552 = vmatprep.subr.bf16.mxu0 0
    %553 = vmatpush1.bf16.msra.mxu0 0
    %554 = vmatprep.subr.bf16.mxu0 0
    %555 = vmatpush1.bf16.msra.mxu0 0
    %556 = vmatprep.subr.bf16.mxu0 0
    %557 = vmatpush1.bf16.msra.mxu0 0
    %558 = vmatprep.subr.bf16.mxu0 0
    %559 = vmatpush1.bf16.msra.mxu0 0
    %560 = vmatprep.subr.bf16.mxu0 0
    %561 = vmatpush1.bf16.msra.mxu0 0
    %562 = vmatprep.subr.bf16.mxu0 0
    %563 = vmatpush1.bf16.msra.mxu0 0
    %564 = vmatprep.subr.bf16.mxu0 0
    %565 = vmatpush1.bf16.msra.mxu0 0
    %566 = vmatprep.subr.bf16.mxu0 0
    %567 = vmatpush1.bf16.msra.mxu0 0
    %568 = vmatprep.subr.bf16.mxu0 0
    %569 = vmatpush1.bf16.msra.mxu0 0
    %570 = vmatprep.mubr.bf16.mxu0 0
    %571 = vmatmul.mubr.bf16.gmra.mrb[0].mxu0 %v527
    %v572 = vpop.f32.mrb[0].mxu0
    %v573 = vadd.f32 %v468, %v572
    %v574 = vpop.f32.mrb[0].mxu0
    %v575 = vpop.f32.mrb[0].mxu0
    %v576 = vadd.f32 %v473, %v575
    %v577 = vpop.f32.mrb[0].mxu0
    %578 = vmatprep.mubr.bf16.mxu0 0
    %579 = vmatmul.mubr.bf16.gmra.mrb[0].mxu0 %v530
    %v580 = vpop.f32.mrb[0].mxu0
    %v581 = vadd.f32 %v478, %v580
    %v582 = vpop.f32.mrb[0].mxu0
    %v583 = vpop.f32.mrb[0].mxu0
    %v584 = vadd.f32 %v483, %v583
    %v585 = vpop.f32.mrb[0].mxu0
    %586 = vmatprep.mubr.bf16.mxu0 0
    %587 = vmatmul.mubr.bf16.gmra.mrb[0].mxu0 %v533
    %v588 = vpop.f32.mrb[0].mxu0
    %v589 = vadd.f32 %v488, %v588
    %v590 = vpop.f32.mrb[0].mxu0
    %v591 = vpop.f32.mrb[0].mxu0
    %v592 = vadd.f32 %v493, %v591
    %v593 = vpop.f32.mrb[0].mxu0
    %594 = vmatprep.mubr.bf16.mxu0 0
    %595 = vmatmul.mubr.bf16.gmra.mrb[0].mxu0 %v536
    %v596 = vpop.f32.mrb[0].mxu0
    %v597 = vadd.f32 %v498, %v596
    %v598 = vpop.f32.mrb[0].mxu0
    %v599 = vpop.f32.mrb[0].mxu0
    %v600 = vadd.f32 %v503, %v599
    %v601 = vpop.f32.mrb[0].mxu0
    %602 = vdwg.mxu0
    %v603 = vmax.f32 %v573, 0.0
    %v604 = vmax.f32 %v576, 0.0
    %v605 = vmax.f32 %v581, 0.0
    %v606 = vmax.f32 %v584, 0.0
    %v607 = vmax.f32 %v589, 0.0
    %v608 = vmax.f32 %v592, 0.0
    %v609 = vmax.f32 %v597, 0.0
    %v610 = vmax.f32 %v600, 0.0
    %v611 = vld [vmem:[%s7] sm:$0xf]
    %v612 = vpack.c.bf16 %v604, %v603
    %v613 = vpack.c.bf16 %v606, %v605
    %v614 = vpack.c.bf16 %v608, %v607
    %v615 = vpack.c.bf16 %v610, %v609
    %v616 = vld [vmem:[%s10] sm:$0xff]
    %618 = vset.pattern.permute.xlu0 0
    %619 = vperm.xlu0 %618, %v616
    %v620 = vpop.permute.xlu0 %619
    %v623 = vsel %vm525, %v611, 0
    %625 = vmatprep.subr.bf16.mxu0 0
    %626 = vmatpush1.bf16.msra.mxu0 %v612
    %627 = vmatprep.subr.bf16.mxu0 0
    %628 = vmatpush1.bf16.msra.mxu0 %v613
    %629 = vmatprep.subr.bf16.mxu0 0
    %630 = vmatpush1.bf16.msra.mxu0 %v614
    %631 = vmatprep.subr.bf16.mxu0 0
    %632 = vmatpush1.bf16.msra.mxu0 %v615
    %633 = vmatprep.subr.bf16.mxu0 0
    %634 = vmatpush1.bf16.msra.mxu0 0
    %635 = vmatprep.subr.bf16.mxu0 0
    %636 = vmatpush1.bf16.msra.mxu0 0
    %637 = vmatprep.subr.bf16.mxu0 0
    %638 = vmatpush1.bf16.msra.mxu0 0
    %639 = vmatprep.subr.bf16.mxu0 0
    %640 = vmatpush1.bf16.msra.mxu0 0
    %641 = vmatprep.subr.bf16.mxu0 0
    %642 = vmatpush1.bf16.msra.mxu0 0
    %643 = vmatprep.subr.bf16.mxu0 0
    %644 = vmatpush1.bf16.msra.mxu0 0
    %645 = vmatprep.subr.bf16.mxu0 0
    %646 = vmatpush1.bf16.msra.mxu0 0
    %647 = vmatprep.subr.bf16.mxu0 0
    %648 = vmatpush1.bf16.msra.mxu0 0
    %649 = vmatprep.subr.bf16.mxu0 0
    %650 = vmatpush1.bf16.msra.mxu0 0
    %651 = vmatprep.subr.bf16.mxu0 0
    %652 = vmatpush1.bf16.msra.mxu0 0
    %653 = vmatprep.subr.bf16.mxu0 0
    %654 = vmatpush1.bf16.msra.mxu0 0
    %655 = vmatprep.subr.bf16.mxu0 0
    %656 = vmatpush1.bf16.msra.mxu0 0
    %657 = vmatprep.mubr.bf16.mxu0 0
    %658 = vmatmul.mubr.bf16.gmra.mrb[0].mxu0 %v623
    %v659 = vpop.f32.mrb[0].mxu0
    %v660 = vadd.f32 %v620, %v659
    %v661 = vpop.f32.mrb[0].mxu0
    %v662 = vpop.f32.mrb[0].mxu0
    %v663 = vpop.f32.mrb[0].mxu0
    %664 = vdwg.mxu0
    %vm665 = vcmask 58368
    %666 = vst.msk [vmem:[#allocation2] sm:$0x3] %vm665, %v660
    // Predicated region
    $region46: #{tpu_custom_call.1} parent=1 // pred_check
      _
    $region47: #{tpu_custom_call.1} parent=1 // pred_check_branch
      %668 = sbr.rel (0) target = $region49
    $region48: #{tpu_custom_call.1} parent=1 // pred_region
      %s670 = ssub.s32 32, 32
      %671 = vsyncadd [#allocation3], %s670
      %s673 = sshll.u32 [#allocation2], 4
      %s674 = int_to_ptr.vmem [resolvable:$true] %s673
      %676 = dma.vmem_to_hbm [thread:$0]  %s674, 32, %s11, [#allocation3]
    $region49: #{tpu_custom_call.1} parent=1 // pred_fallthru
      _
    // Predicated region
    $region50: #{tpu_custom_call.1} parent=1 // pred_check
      _
    $region51: #{tpu_custom_call.1} parent=1 // pred_check_branch
      %678 = sbr.rel (0) target = $region53
    $region52: #{tpu_custom_call.1} parent=1 // pred_region
      %679 = dma.done [#allocation3], 32
    $region53: #{tpu_custom_call.1} parent=1 // pred_fallthru
      _
    %680 = vsyncpa [#allocation3], 1

</llo_original>
